<compile_context>
chip_gen: v7x
topology: tpu7x:2x2x1
jax: 0.10.0
libtpu: 0.0.40
codegen_flags: <defaults>
</compile_context>

<pallas_src>
import functools
import math
import numpy as np

import jax
import jax.numpy as jnp
from jax.experimental import pallas as pl
from jax.experimental.pallas import tpu as pltpu

# ----------------------------- configuration -------------------------------
B = 2            # batch
L = 128          # audio length
C_RES = 32       # residual channels
C_SKIP = 32      # skip channels
N_LAYERS = 3
DILATIONS = (1, 2, 4)
T_STEPS = 100
BETA_1, BETA_2 = 1e-4, 0.02
EMB_IN, EMB_MID, EMB_OUT = 16, 32, 32
NUM_CLASSES = 10


# ----------------------------- fused Pallas kernel --------------------------

def _diffwave_kernel(xn_ref, cond_ref, wdil_ref, wrs_ref, wo1_ref, misc_ref,
                     o_ref, *, n_seg, seg_len, dilations, c, cs,
                     roll_jnp_style):
    """Fused q-sample + DiffWave decoder on a (channels, lanes) slab.

    xn_ref   : (4, 1, n)        rows = [x, noise, sqrt_ac, sqrt_1m_ac]
    cond_ref : (NL, n_seg, 3c,1) per-layer [t_proj (c) ; label_proj+b_dil (2c)]
    wdil_ref : (NL, 2c, 3c)     bf16 tap-fused dilated conv weights
    wrs_ref  : (NL, c+cs, c)    bf16 fused residual+skip 1x1 conv weights
    wo1_ref  : (cs, cs)         bf16 output conv 1 (pre-scaled by 1/sqrt(NL))
    misc_ref : (5+NL, c+cs, 1)  f32  [w_in, b_in, b_out1, w_out2, b_out2,
                                      b_res|b_skip per layer]
    o_ref    : (1, n)
    """
    f32, bf16 = jnp.float32, jnp.bfloat16
    n = xn_ref.shape[-1]

    # fused forward_diffusion_sample: x_noisy = sqrt(ac)*x + sqrt(1-ac)*noise
    x_noisy = xn_ref[2] * xn_ref[0] + xn_ref[3] * xn_ref[1]           # (1, n)

    # input 1x1 conv, Cin=1: VPU broadcast MAC (no MXU)
    w_in = misc_ref[0][:c]
    b_in = misc_ref[1][:c]
    h = jnp.maximum(w_in * x_noisy + b_in, 0.0)                       # (c, n)

    # hoisted (1, n) lane index; per-L-segment position for boundary masks
    col = jax.lax.broadcasted_iota(jnp.int32, (1, n), 1)
    col_mod = col % seg_len
    inv_sqrt2 = 1.0 / math.sqrt(2.0)
    skip = jnp.zeros((cs, n), f32)

    def roll_by(v, k):
        # out[:, i] = v[:, (i - k) % n]   (direction fixed by runtime probe)
        shift = k if roll_jnp_style else (n - k) % n
        return pltpu.roll(v, shift=shift, axis=1)

    # layer loop unrolled (N_LAYERS tiny) -> dilations are static
    for l, d in enumerate(dilations):
        cv = cond_ref[l]                                  # (n_seg, 3c, 1)
        cond_l = cv[0]                                    # (3c, 1)
        for si in range(1, n_seg):                        # per-batch lane select
            cond_l = jnp.where(col >= si * seg_len, cv[si], cond_l)
        t_col = cond_l[:c]
        g_col = cond_l[c:]                                # includes b_dil

        x_in = h + t_col                                  # (c, n)
        # dilated k=3 conv taps: lane rolls + zero-pad masks
        x_prev = jnp.where(col_mod >= d, roll_by(x_in, d), 0.0)
        x_next = jnp.where(col_mod < seg_len - d, roll_by(x_in, n - d), 0.0)
        x3 = jnp.concatenate([x_prev, x_in, x_next], axis=0).astype(bf16)

        # one bf16 MXU matmul covers all 3 taps AND both tanh/sigmoid halves
        z = jnp.dot(wdil_ref[l], x3, preferred_element_type=f32) + g_col
        gate = jnp.tanh(z[:c]) * jax.nn.sigmoid(z[c:])                # (c, n)

        # fused residual + skip projection
        rs = jnp.dot(wrs_ref[l], gate.astype(bf16),
                     preferred_element_type=f32) + misc_ref[5 + l]    # (c+cs, n)
        h = (h + rs[:c]) * inv_sqrt2
        skip = skip + rs[c:]

    # output convs (1/sqrt(NL) already folded into wo1)
    o1 = jnp.dot(wo1_ref[...], skip.astype(bf16),
                 preferred_element_type=f32) + misc_ref[2][:cs]
    o1 = jnp.maximum(o1, 0.0)
    w_o2 = misc_ref[3][:cs]                                           # (cs, 1)
    o = jnp.sum(w_o2 * o1, axis=0, keepdims=True) + misc_ref[4][0:1]  # (1, n)
    o_ref[...] = o.astype(o_ref.dtype)


# ----------------------------- parameters / buffers --------------------------

def init_params(key, *, nonzero_test_init=False):
    def w(k, shape, fan_in):
        return jax.random.normal(k, shape, jnp.float32) / math.sqrt(fan_in)

    def bias(k, shape):
        if nonzero_test_init:
            return 0.1 * jax.random.normal(k, shape, jnp.float32)
        return jnp.zeros(shape, jnp.float32)

    ks = iter(jax.random.split(key, 64))
    p = {
        "w_in": w(next(ks), (1, C_RES), 1),
        "b_in": bias(next(ks), (1, C_RES)),
        "w_fc1": w(next(ks), (EMB_IN, EMB_MID), EMB_IN),
        "b_fc1": bias(next(ks), (1, EMB_MID)),
        "w_fc2": w(next(ks), (EMB_MID, EMB_OUT), EMB_MID),
        "b_fc2": bias(next(ks), (1, EMB_OUT)),
        "label_embed": w(next(ks), (NUM_CLASSES, EMB_OUT), 1.0),
        "w_out1": w(next(ks), (C_SKIP, C_SKIP), C_SKIP),
        "b_out1": bias(next(ks), (1, C_SKIP)),
        # DiffWave zero-initialises the final projection conv.
        "w_out2": (w(next(ks), (C_SKIP, 1), C_SKIP) if nonzero_test_init
                   else jnp.zeros((C_SKIP, 1), jnp.float32)),
        "b_out2": bias(next(ks), (1, 1)),
        "layers": [],
    }
    for _ in range(N_LAYERS):
        p["layers"].append(dict(
            w_t=w(next(ks), (EMB_OUT, C_RES), EMB_OUT),
            b_t=bias(next(ks), (1, C_RES)),
            w_cond=w(next(ks), (EMB_OUT, 2 * C_RES), EMB_OUT),
            b_cond=bias(next(ks), (1, 2 * C_RES)),
            w_dil=w(next(ks), (3, C_RES, 2 * C_RES), 3 * C_RES),   # (k, in, out)
            b_dil=bias(next(ks), (1, 2 * C_RES)),
            w_res=w(next(ks), (C_RES, C_RES), C_RES),
            b_res=bias(next(ks), (1, C_RES)),
            w_skip=w(next(ks), (C_RES, C_SKIP), C_RES),
            b_skip=bias(next(ks), (1, C_SKIP)),
        ))
    return p


def prepare_params(params):
    """One-time packing of the weights for the fused kernel (NOT per call)."""
    c, cs, nl = C_RES, C_SKIP, N_LAYERS
    layers = params["layers"]
    bf16 = jnp.bfloat16

    packed = {
        "w_fc1": params["w_fc1"], "b_fc1": params["b_fc1"],
        "w_fc2": params["w_fc2"], "b_fc2": params["b_fc2"],
        "label_embed": params["label_embed"],
        # stacked per-layer conditioning projections -> one matmul each per call
        "w_t_stack": jnp.concatenate([lp["w_t"] for lp in layers], axis=1),
        "b_t_stack": jnp.concatenate([lp["b_t"] for lp in layers], axis=1),
        "w_c_stack": jnp.concatenate([lp["w_cond"] for lp in layers], axis=1),
        # fold the dilated-conv bias into the conditioning bias (same add site)
        "b_c_stack": jnp.concatenate([lp["b_cond"] + lp["b_dil"]
                                      for lp in layers], axis=1),
        # tap-fused dilated-conv weights: columns = [tap x[i-d] | x[i] | x[i+d]]
        "w_dil3": jnp.stack(
            [jnp.concatenate([lp["w_dil"][k].T for k in range(3)], axis=1)
             for lp in layers]).astype(bf16),                      # (nl, 2c, 3c)
        # fused residual + skip 1x1 convs
        "w_rs": jnp.stack(
            [jnp.concatenate([lp["w_res"].T, lp["w_skip"].T], axis=0)
             for lp in layers]).astype(bf16),                      # (nl, c+cs, c)
        # fold the 1/sqrt(n_layers) skip normalisation into the output conv 1
        "w_o1": (params["w_out1"].T / math.sqrt(nl)).astype(bf16),  # (cs, cs)
    }
    # small f32 parameters packed into one tensor (one DMA stream)
    misc = jnp.zeros((5 + nl, c + cs, 1), jnp.float32)
    misc = misc.at[0, :c, 0].set(params["w_in"][0])
    misc = misc.at[1, :c, 0].set(params["b_in"][0])
    misc = misc.at[2, :cs, 0].set(params["b_out1"][0])
    misc = misc.at[3, :cs, 0].set(params["w_out2"][:, 0])
    misc = misc.at[4, 0, 0].set(params["b_out2"][0, 0])
    for l, lp in enumerate(layers):
        misc = misc.at[5 + l, :c, 0].set(lp["b_res"][0])
        misc = misc.at[5 + l, c:, 0].set(lp["b_skip"][0])
    packed["misc"] = misc
    return packed


def make_buffers():
    # Registered buffers: computed in float64 (torch .double()), stored as f32.
    betas = np.linspace(BETA_1, BETA_2, T_STEPS, dtype=np.float64)
    alphas = 1.0 - betas
    alphas_cumprod = np.cumprod(alphas)
    return {
        "sqrt_alphas_cumprod":
            jnp.asarray(np.sqrt(alphas_cumprod), jnp.float32),
        "sqrt_one_minus_alphas_cumprod":
            jnp.asarray(np.sqrt(1.0 - alphas_cumprod), jnp.float32),
    }


def diffusion_step_embedding(t):
    half = EMB_IN // 2
    freqs = np.exp(np.arange(half) * -(math.log(10000.0) / (half - 1)))
    args = t.astype(jnp.float32)[:, None] * jnp.asarray(freqs, jnp.float32)[None, :]
    return jnp.concatenate([jnp.sin(args), jnp.cos(args)], axis=1)   # (B, EMB_IN)


def _swish(v):
    return v * jax.nn.sigmoid(v)


# ----------------------------- forward (wrapper) -----------------------------

def diffusion_model_forward(packed, buffers, x, t, noise, label, *,
                            batch_in_lanes=True, roll_jnp_style=True):
    """Equivalent of DiffusionModel.forward: returns (noise, noise_pred)."""
    bsz, _, seq = x.shape
    c, cs, nl = C_RES, C_SKIP, N_LAYERS

    a = buffers["sqrt_alphas_cumprod"][t]                        # (B,)
    s = buffers["sqrt_one_minus_alphas_cumprod"][t]              # (B,)

    # --- (t, label)-dependent conditioning: tiny, left to XLA ---------------
    # TODO(synk): real DiffWave conditions on an upsampled mel spectrogram; a
    # class-label embedding broadcast over time is used here instead.
    emb = diffusion_step_embedding(t)
    emb = _swish(emb @ packed["w_fc1"] + packed["b_fc1"])
    emb = _swish(emb @ packed["w_fc2"] + packed["b_fc2"])        # (B, 32)
    lab = packed["label_embed"][label]                           # (B, 32)
    t_rows = emb @ packed["w_t_stack"] + packed["b_t_stack"]     # (B, nl*c)
    c_rows = lab @ packed["w_c_stack"] + packed["b_c_stack"]     # (B, nl*2c)
    cond = jnp.concatenate([t_rows.reshape(bsz, nl, c),
                            c_rows.reshape(bsz, nl, 2 * c)], axis=2)  # (B, nl, 3c)

    w_args = (packed["w_dil3"], packed["w_rs"], packed["w_o1"], packed["misc"])
    w_specs = [
        pl.BlockSpec((nl, 2 * c, 3 * c), lambda b: (0, 0, 0)),   # w_dil3 (bf16)
        pl.BlockSpec((nl, c + cs, c), lambda b: (0, 0, 0)),      # w_rs   (bf16)
        pl.BlockSpec((cs, cs), lambda b: (0, 0)),                # w_o1   (bf16)
        pl.BlockSpec((5 + nl, c + cs, 1), lambda b: (0, 0, 0)),  # misc   (f32)
    ]

    if batch_in_lanes:
        # single-TC chips (v5e/v6e): fold batch into lanes -> N = B*L = 256
        n = bsz * seq
        xn = jnp.stack([x.reshape(1, n), noise.reshape(1, n),
                        jnp.repeat(a, seq)[None, :],
                        jnp.repeat(s, seq)[None, :]], axis=0)    # (4, 1, n)
        cond_k = jnp.transpose(cond, (1, 0, 2))[..., None]       # (nl, B, 3c, 1)
        kernel = functools.partial(
            _diffwave_kernel, n_seg=bsz, seg_len=seq, dilations=DILATIONS,
            c=c, cs=cs, roll_jnp_style=roll_jnp_style)
        out = pl.pallas_call(
            kernel,
            grid=(1,),
            in_specs=[pl.BlockSpec((4, 1, n), lambda b: (0, 0, 0)),
                      pl.BlockSpec((nl, bsz, 3 * c, 1), lambda b: (0, 0, 0, 0)),
                      *w_specs],
            out_specs=pl.BlockSpec((1, n), lambda b: (0, 0)),
            out_shape=jax.ShapeDtypeStruct((1, n), jnp.float32),
            compiler_params=pltpu.CompilerParams(
                dimension_semantics=("arbitrary",)),
        )(xn, cond_k, *w_args)
        noise_pred = out.reshape(bsz, 1, seq)
    else:
        # multi-TC chips (v7x): one batch element per TensorCore
        a_b = jnp.broadcast_to(a[:, None, None], (bsz, 1, seq))
        s_b = jnp.broadcast_to(s[:, None, None], (bsz, 1, seq))
        xn = jnp.stack([x, noise, a_b, s_b], axis=1)             # (B, 4, 1, L)
        cond_k = cond[:, :, None, :, None]                       # (B, nl, 1, 3c, 1)
        kernel = functools.partial(
            _diffwave_kernel, n_seg=1, seg_len=seq, dilations=DILATIONS,
            c=c, cs=cs, roll_jnp_style=roll_jnp_style)
        noise_pred = pl.pallas_call(
            kernel,
            grid=(bsz,),
            in_specs=[pl.BlockSpec((None, 4, 1, seq), lambda b: (b, 0, 0, 0)),
                      pl.BlockSpec((None, nl, 1, 3 * c, 1),
                                   lambda b: (b, 0, 0, 0, 0)),
                      *w_specs],
            out_specs=pl.BlockSpec((None, 1, seq), lambda b: (b, 0, 0)),
            out_shape=jax.ShapeDtypeStruct((bsz, 1, seq), jnp.float32),
            compiler_params=pltpu.CompilerParams(
                dimension_semantics=("parallel",)),
        )(xn, cond_k, *w_args)

    return noise, noise_pred


# ----------------------------- pure-JAX reference ----------------------------

def reference_forward(params, buffers, x, t, noise, label):
    """f32, non-Pallas reference with identical semantics (for validation)."""
    bsz, _, seq = x.shape
    c, cs = C_RES, C_SKIP
    a = buffers["sqrt_alphas_cumprod"][t][:, None, None]
    s = buffers["sqrt_one_minus_alphas_cumprod"][t][:, None, None]
    x_noisy = a * x + s * noise

    emb = diffusion_step_embedding(t)
    emb = _swish(emb @ params["w_fc1"] + params["b_fc1"])
    emb = _swish(emb @ params["w_fc2"] + params["b_fc2"])
    lab = params["label_embed"][label]

    preds = []
    for b in range(bsz):
        h = jnp.maximum(params["w_in"].T * x_noisy[b] + params["b_in"].T, 0.0)
        skip = jnp.zeros((cs, seq), jnp.float32)
        for l, d in enumerate(DILATIONS):
            lp = params["layers"][l]
            t_col = (emb[b] @ lp["w_t"] + lp["b_t"][0])[:, None]
            c_col = (lab[b] @ lp["w_cond"] + lp["b_cond"][0])[:, None]
            x_in = h + t_col
            xp = jnp.pad(x_in, ((0, 0), (d, d)))
            z = sum(lp["w_dil"][k].T @ xp[:, k * d:k * d + seq] for k in range(3))
            z = z + lp["b_dil"].T + c_col
            gate = jnp.tanh(z[:c]) * jax.nn.sigmoid(z[c:])
            res = lp["w_res"].T @ gate + lp["b_res"].T
            sk = lp["w_skip"].T @ gate + lp["b_skip"].T
            h = (h + res) / math.sqrt(2.0)
            skip = skip + sk
        skip = skip / math.sqrt(N_LAYERS)
        o1 = jnp.maximum(params["w_out1"].T @ skip + params["b_out1"].T, 0.0)
        preds.append(params["w_out2"].T @ o1 + params["b_out2"].T)
    return jnp.stack(preds, axis=0)                               # (B, 1, L)


# ----------------------------- helpers ---------------------------------------

def _roll_is_jnp_style():
    """Probe pltpu.roll direction once (jnp.roll: out[i] = x[i-shift])."""
    def _k(x_ref, o_ref):
        o_ref[...] = pltpu.roll(x_ref[...], shift=1, axis=1)
    x = jnp.arange(8 * 128, dtype=jnp.float32).reshape(8, 128)
    y = pl.pallas_call(_k, out_shape=jax.ShapeDtypeStruct((8, 128), jnp.float32))(x)
    return bool(np.asarray(y)[0, 0] == 127.0)


def _default_batch_in_lanes():
    try:
        kind = jax.devices()[0].device_kind.lower()
    except Exception:
        return True
    # v7x has 2 TensorCores/chip: keep grid=(B,) there so both cores work.
    return "v7" not in kind


# --------------------------------- main -------------------------------------

if __name__ == "__main__":
    key = jax.random.PRNGKey(0)
    k_x, k_n, k_p, k_chk = jax.random.split(key, 4)

    x = jax.random.normal(k_x, (B, 1, L), jnp.float32)       # (B, 1, L) NCL
    noise = jax.random.normal(k_n, (B, 1, L), jnp.float32)   # randn_like(x)
    t = jnp.array([5, 50], jnp.int32)
    label = jnp.array([1, 3], jnp.int32)
    buffers = make_buffers()

    roll_jnp = _roll_is_jnp_style()

    # Structural/numerical check with NON-zero weights against the pure-JAX
    # reference (the real model's final conv is zero-init, so its output alone
    # cannot catch a tap/roll/packing mistake).  Checks both grid strategies.
    chk_raw = init_params(k_chk, nonzero_test_init=True)
    chk_ref = np.asarray(reference_forward(chk_raw, buffers, x, t, noise, label))
    chk_packed = prepare_params(chk_raw)
    for lanes in (True, False):
        _, pred = diffusion_model_forward(chk_packed, buffers, x, t, noise, label,
                                          batch_in_lanes=lanes,
                                          roll_jnp_style=roll_jnp)
        np.testing.assert_allclose(np.asarray(pred), chk_ref, rtol=8e-2, atol=8e-2)

    # Real model (faithful init: zero final conv), packed once, jitted forward.
    params = init_params(k_p)
    packed = prepare_params(params)
    lanes_default = _default_batch_in_lanes()
    fwd = jax.jit(lambda pk, bf, xi, ti, ni, li: diffusion_model_forward(
        pk, bf, xi, ti, ni, li,
        batch_in_lanes=lanes_default, roll_jnp_style=roll_jnp))

    noise_out, noise_pred = fwd(packed, buffers, x, t, noise, label)
    jax.block_until_ready((noise_out, noise_pred))

    assert noise_out.shape == x.shape
    assert noise_pred.shape == x.shape
    assert noise_pred.dtype == jnp.float32
    assert bool(jnp.all(jnp.isfinite(noise_pred)))
    print("KERNEL_OK")
</pallas_src>

<mosaic_0001>
module attributes {stable_mosaic.version = 11 : i64} {
  func.func @_k(%arg0: memref<8x128xf32, #tpu.memory_space<vmem>>, %arg1: memref<8x128xf32, #tpu.memory_space<vmem>>) attributes {dimension_semantics = [], scalar_prefetch = 0 : i64, scratch_operands = 0 : i64, tpu.core_type = #tpu.core_type<tc>} {
    %c0 = arith.constant 0 : index
    %c0_0 = arith.constant 0 : index
    %0 = vector.load %arg0[%c0, %c0_0] : memref<8x128xf32, #tpu.memory_space<vmem>>, vector<8x128xf32>
    %c1_i32 = arith.constant 1 : i32
    %1 = tpu.dynamic_rotate %0 by %c1_i32 dim 1 : vector<8x128xf32>, i32 -> vector<8x128xf32>
    %c0_1 = arith.constant 0 : index
    %c0_2 = arith.constant 0 : index
    %2 = vector.load %arg1[%c0_1, %c0_2] : memref<8x128xf32, #tpu.memory_space<vmem>>, vector<8x128xf32>
    tpu.vector_store %arg1[%c0_1, %c0_2], %1 {strides = array<i32>} : memref<8x128xf32, #tpu.memory_space<vmem>>, vector<8x128xf32>,
    return
  }
}

</mosaic_0001>

<llo_original>
// kernel: tpu_custom_call.1
$region0: #{tpu_custom_call.1}
  #allocation0 [shape = 'u32[]', space=smem, size = 0x4, offset = 0x4, fixed_abs, tag = 'smem constant byte address 0x4 - core index']
  #allocation1 [shape = 'u32[144,128]{1,0:T(1,128)}', space=vmem, size = 0x12000, scoped, tag = 'internal scratch']
  %s0 = inlined_call_operand.hbm [shape: f32[8,128], index: 0, kind: input, shape index: {}]
  %s1 = inlined_call_operand.hbm [shape: f32[8,128], index: 1, kind: output, shape index: {}]
  %s2 = sld [smem:[#allocation0]]
  $region18: #{tpu_custom_call.1} parent=0
    _
  %s4 = ssub.s32 1, %s2
  %s5 = scalar_select 0, %s4, %s2
  $region1: #{tpu_custom_call.1} parent=0
    #allocation2 [shape = 'u8[4096]{0}', space=vmem, size = 0x1000, scoped, tag = 'input window, operand 0, single buffered']
    #allocation3 [shape = 's32[1]{0}', space=sflag, size = 0x4, scoped, tag = 'scoped memory for tpu_custom_call.1']
    #allocation4 [shape = 's32[1]{0}', space=sflag, size = 0x4, scoped, tag = 'scoped memory for tpu_custom_call.1']
    #allocation5 [shape = 'u8[4096]{0}', space=vmem, size = 0x1000, scoped, tag = 'output window, operand 0, single buffered']
    %6 = vsyncpa [#allocation3], 0
    %7 = vsyncpa [#allocation4], 0
    // Predicated region
    $region2: #{tpu_custom_call.1} parent=1 // pred_check
      _
    $region3: #{tpu_custom_call.1} parent=1 // pred_check_branch
      %9 = sbr.rel (0) target = $region5
    $region4: #{tpu_custom_call.1} parent=1 // pred_region
      %s11 = ssub.s32 128, 128
      %12 = vsyncadd [#allocation3], %s11
      %s14 = sshll.u32 [#allocation2], 4
      %s15 = int_to_ptr.vmem [resolvable:$true] %s14
      %17 = dma.hbm_to_vmem [thread:$0]  %s0, 128, %s15, [#allocation3]
    $region5: #{tpu_custom_call.1} parent=1 // pred_fallthru
      _
    // Predicated region
    $region6: #{tpu_custom_call.1} parent=1 // pred_check
      _
    $region7: #{tpu_custom_call.1} parent=1 // pred_check_branch
      %19 = sbr.rel (0) target = $region9
    $region8: #{tpu_custom_call.1} parent=1 // pred_region
      %20 = dma.done [#allocation3], 128
    $region9: #{tpu_custom_call.1} parent=1 // pred_fallthru
      _
    %v21 = vld [vmem:[#allocation2] sm:$0xff]
    %22 = vrot.lane.b32.xlu0 %v21, 1
    %v23 = vpop.permute.xlu0 %22
    %24 = vst [vmem:[#allocation5] sm:$0xff] %v23
    // Predicated region
    $region10: #{tpu_custom_call.1} parent=1 // pred_check
      _
    $region11: #{tpu_custom_call.1} parent=1 // pred_check_branch
      %26 = sbr.rel (0) target = $region13
    $region12: #{tpu_custom_call.1} parent=1 // pred_region
      %s28 = ssub.s32 128, 128
      %29 = vsyncadd [#allocation4], %s28
      %s31 = sshll.u32 [#allocation5], 4
      %s32 = int_to_ptr.vmem [resolvable:$true] %s31
      %34 = dma.vmem_to_hbm [thread:$0]  %s32, 128, %s1, [#allocation4]
    $region13: #{tpu_custom_call.1} parent=1 // pred_fallthru
      _
    // Predicated region
    $region14: #{tpu_custom_call.1} parent=1 // pred_check
      _
    $region15: #{tpu_custom_call.1} parent=1 // pred_check_branch
      %36 = sbr.rel (0) target = $region17
    $region16: #{tpu_custom_call.1} parent=1 // pred_region
      %37 = dma.done [#allocation4], 128
    $region17: #{tpu_custom_call.1} parent=1 // pred_fallthru
      _
    %38 = vsyncpa [#allocation3], 1
    %39 = vsyncpa [#allocation4], 1

</llo_original>
